<compile_context>
chip_gen: v7x
topology: tpu7x:2x2x1
jax: 0.10.0
libtpu: 0.0.40
codegen_flags: <defaults>
</compile_context>

<pallas_src>
import functools

import jax
import jax.numpy as jnp
import numpy as np
from jax.experimental import pallas as pl
from jax.experimental.pallas import tpu as pltpu

_LANE = 128
_HARD_MAX_SEQ_TILE = 16384          # v7x-safe even with generous headroom
_VMEM_WORKING_SET_BUDGET = 40 << 20 # bytes used to cap the tile size


def _round_up(x: int, m: int) -> int:
    return ((x + m - 1) // m) * m


def _basisnet_kernel(n_hidden, tanh_dtype, x_ref, w_in_ref, *rest):
    """Fused MLP for one S-tile: matmuls + tanh all on-chip.

    Refs (all VMEM blocks):
      x_ref:              (in_features, TS)      -- moves with the grid
      w_in_ref:           (hidden, in_features)  -- pinned (constant index_map)
      rest[:n_hidden]:    hidden weights, each (hidden, hidden)  -- pinned
      rest[n_hidden]:     w_out, (output_size, hidden)           -- pinned
      rest[n_hidden + 1]: output block, (output_size, TS)
    """
    w_hidden_refs = rest[:n_hidden]
    w_out_ref = rest[n_hidden]
    o_ref = rest[n_hidden + 1]

    operand_dtype = x_ref.dtype  # dtype fed to the MXU (bf16 when io_dtype=bf16)

    # MXU accumulates in f32.  tanh runs in `tanh_dtype`: f32 by default
    # (required on v5e), optionally bf16 on v6e/v7x when the EUP binds.
    acc = jnp.dot(w_in_ref[...], x_ref[...], preferred_element_type=jnp.float32)
    h = jnp.tanh(acc.astype(tanh_dtype))
    for w_ref in w_hidden_refs:
        acc = jnp.dot(w_ref[...], h.astype(operand_dtype),
                      preferred_element_type=jnp.float32)
        h = jnp.tanh(acc.astype(tanh_dtype))
    o_ref[...] = jnp.dot(
        w_out_ref[...], h.astype(operand_dtype),
        preferred_element_type=jnp.float32
    ).astype(o_ref.dtype)


def _per_column_vmem_bytes(in_features, hidden, output_size, io_bytes):
    # double-buffered x block + double-buffered out block + ~4 live (hidden,TS)
    # f32 temps (accumulator / tanh result per layer, conservatively).
    return (2 * in_features + 2 * output_size) * io_bytes + 4 * hidden * 4


def _select_tiling(seq, seq_tile_hint, per_col_bytes):
    """Pick (seq_tile, padded_seq) with seq_tile | padded_seq.

    Prefers tiles that divide round_up(seq, 128) (zero extra padding / no
    pad-crop HBM passes); falls back to padding up to one tile when the only
    exact divisors are much smaller than the hint (few big steps beat many
    tiny ones).  Keeps >= 2 grid steps when possible so v7x can use both TCs.
    """
    padded_min = _round_up(seq, _LANE)

    vmem_cap = max(_LANE,
                   (_VMEM_WORKING_SET_BUDGET // per_col_bytes) // _LANE * _LANE)
    hint = max(_LANE, _round_up(seq_tile_hint, _LANE))
    hint = min(hint, _HARD_MAX_SEQ_TILE, vmem_cap, padded_min)
    if padded_min >= 2 * _LANE:
        # Leave room for >= 2 grid steps (v7x TC sharding; ~free elsewhere).
        hint = min(hint, (padded_min // 2) // _LANE * _LANE)
    hint = max(hint, _LANE)

    # Largest multiple of 128 <= hint that divides padded_min exactly.
    best_divisor = _LANE
    t = hint
    while t >= _LANE:
        if padded_min % t == 0:
            best_divisor = t
            break
        t -= _LANE

    if best_divisor >= max(_LANE, hint // 4):
        return best_divisor, padded_min

    # Fallback: accept up to (hint - 1) columns of padding to keep big tiles.
    return hint, _round_up(seq, hint)


def basisnet_forward(x, w_in, w_hidden, w_out, *, seq_tile=8192,
                     io_dtype=None, tanh_dtype=jnp.float32):
    """x: (in_features, S) -> (output_size, S), matching torch's output.T.

    seq_tile:   sequence-tile hint (sweepable); clamped by VMEM budget and
                adjusted so the tile divides the (minimally) padded sequence.
    io_dtype:   optionally cast HBM-facing arrays (x, weights, output) to e.g.
                jnp.bfloat16.  With 8-row x/out this does NOT halve HBM
                traffic (bf16 (16,128) sublane padding) — it mainly keeps the
                MXU on its native bf16 path.  Accumulation stays f32.
    tanh_dtype: jnp.float32 (default, v5e-safe) or jnp.bfloat16 on v6e/v7x if
                the EUP (tanh) slot is the binding unit.
    """
    in_features, seq = x.shape
    hidden = w_in.shape[0]
    output_size = w_out.shape[0]
    n_hidden = len(w_hidden)

    if io_dtype is not None:
        x = x.astype(io_dtype)
        w_in = w_in.astype(io_dtype)
        w_hidden = [w.astype(io_dtype) for w in w_hidden]
        w_out = w_out.astype(io_dtype)
    out_dtype = x.dtype
    io_bytes = jnp.dtype(out_dtype).itemsize

    per_col = _per_column_vmem_bytes(in_features, hidden, output_size, io_bytes)
    seq_tile, padded_seq = _select_tiling(seq, seq_tile, per_col)

    if padded_seq != seq:
        # Zero padding flows through the bias-free tanh chain as zeros and is
        # cropped before returning.
        x = jnp.pad(x, ((0, 0), (0, padded_seq - seq)))

    grid = (padded_seq // seq_tile,)
    kernel = functools.partial(_basisnet_kernel, n_hidden, tanh_dtype)

    weight_bytes = 2 * io_bytes * (hidden * in_features
                                   + n_hidden * hidden * hidden
                                   + output_size * hidden)
    vmem_est = per_col * seq_tile + weight_bytes
    vmem_limit = int(min(max(2 * vmem_est, 32 << 20), 48 << 20))

    def pinned(shape):
        # Constant block index -> weight stays resident across grid steps.
        return pl.BlockSpec(shape, lambda i: (0, 0))

    out = pl.pallas_call(
        kernel,
        out_shape=jax.ShapeDtypeStruct((output_size, padded_seq), out_dtype),
        grid=grid,
        in_specs=[pl.BlockSpec((in_features, seq_tile), lambda i: (0, i)),
                  pinned((hidden, in_features))]
                 + [pinned((hidden, hidden)) for _ in range(n_hidden)]
                 + [pinned((output_size, hidden))],
        out_specs=pl.BlockSpec((output_size, seq_tile), lambda i: (0, i)),
        compiler_params=pltpu.CompilerParams(
            dimension_semantics=("parallel",),   # 2 TCs on v7x
            vmem_limit_bytes=vmem_limit,
        ),
    )(x, w_in, *w_hidden, w_out)

    if padded_seq != seq:
        out = out[:, :seq]
    return out


if __name__ == "__main__":
    # Small shapes consistent with the module's forward:
    #   in_features=8, input_size (seq)=16, output_size=8, hidden=32, layers=3
    in_features = 8
    input_size = 16       # sequence / temporal dimension (x's second axis)
    output_size = 8
    hidden_features = 32
    layers = 3

    key = jax.random.PRNGKey(0)
    ks = jax.random.split(key, layers + 4)

    x = jax.random.normal(ks[0], (in_features, input_size), jnp.float32)
    w_in = 0.1 * jax.random.normal(
        ks[1], (hidden_features, in_features), jnp.float32)
    w_hidden = [
        0.1 * jax.random.normal(
            ks[2 + i], (hidden_features, hidden_features), jnp.float32)
        for i in range(layers - 1)
    ]
    w_out = 0.1 * jax.random.normal(
        ks[layers + 1], (output_size, hidden_features), jnp.float32)

    # TODO(synk): temporal_layer (Linear(input_size, input_size) with bias) and
    # ELU exist in __init__ but are unused in forward; intentionally not built.

    # Pure-JAX reference mirroring the torch forward exactly.
    def ref_forward(xx, wi, whs, wo):
        h = jnp.tanh(xx.T @ wi.T)
        for w in whs:
            h = jnp.tanh(h @ w.T)
        return (h @ wo.T).T

    # --- 1) Small f32 case (single tile, pad 16->128, crop) -----------------
    out = jax.block_until_ready(basisnet_forward(x, w_in, w_hidden, w_out))
    ref = jax.block_until_ready(ref_forward(x, w_in, w_hidden, w_out))
    assert out.shape == (output_size, input_size), out.shape
    np.testing.assert_allclose(np.asarray(out), np.asarray(ref),
                               rtol=1e-5, atol=1e-5)

    # --- 2) Multi-tile f32, divisor path (seq=640 -> tile=128, grid=5,
    #        zero padding, no crop copy) ------------------------------------
    seq_b = 640
    x_b = jax.random.normal(ks[layers + 2], (in_features, seq_b), jnp.float32)
    out_b = jax.block_until_ready(
        basisnet_forward(x_b, w_in, w_hidden, w_out))
    ref_b = jax.block_until_ready(ref_forward(x_b, w_in, w_hidden, w_out))
    assert out_b.shape == (output_size, seq_b), out_b.shape
    np.testing.assert_allclose(np.asarray(out_b), np.asarray(ref_b),
                               rtol=1e-5, atol=1e-5)

    # --- 3) Fallback path (seq=2176=128*17: no useful divisor <= hint, so
    #        tile=1024, padded to 3072, grid=3, crop) ------------------------
    seq_c = 2176
    x_c = jax.random.normal(ks[layers + 3], (in_features, seq_c), jnp.float32)
    out_c = jax.block_until_ready(
        basisnet_forward(x_c, w_in, w_hidden, w_out))
    ref_c = jax.block_until_ready(ref_forward(x_c, w_in, w_hidden, w_out))
    assert out_c.shape == (output_size, seq_c), out_c.shape
    np.testing.assert_allclose(np.asarray(out_c), np.asarray(ref_c),
                               rtol=1e-5, atol=1e-5)

    # --- 4) bf16 MXU operands + bf16 tanh (v6e/v7x EUP path), f32 accum -----
    out_bf16 = jax.block_until_ready(
        basisnet_forward(x_b, w_in, w_hidden, w_out,
                         io_dtype=jnp.bfloat16, tanh_dtype=jnp.bfloat16))

    def ref_forward_bf16(xx, wi, whs, wo):
        bf = jnp.bfloat16
        h = jnp.tanh(
            jnp.dot(xx.T.astype(bf), wi.T.astype(bf),
                    preferred_element_type=jnp.float32).astype(bf))
        for w in whs:
            h = jnp.tanh(
                jnp.dot(h, w.T.astype(bf),
                        preferred_element_type=jnp.float32).astype(bf))
        return jnp.dot(h, wo.T.astype(bf),
                       preferred_element_type=jnp.float32).T

    ref_bf16 = jax.block_until_ready(
        ref_forward_bf16(x_b, w_in, w_hidden, w_out))
    assert out_bf16.dtype == jnp.bfloat16
    np.testing.assert_allclose(np.asarray(out_bf16, dtype=np.float32),
                               np.asarray(ref_bf16, dtype=np.float32),
                               rtol=5e-2, atol=5e-2)

    print("KERNEL_OK")
</pallas_src>

<mosaic_0001>
module attributes {stable_mosaic.version = 11 : i64} {
  func.func @_basisnet_kernel(%arg0: i32, %arg1: memref<8x128xf32, #tpu.memory_space<vmem>>, %arg2: memref<32x8xf32, #tpu.memory_space<vmem>>, %arg3: memref<32x32xf32, #tpu.memory_space<vmem>>, %arg4: memref<32x32xf32, #tpu.memory_space<vmem>>, %arg5: memref<8x32xf32, #tpu.memory_space<vmem>>, %arg6: memref<8x128xf32, #tpu.memory_space<vmem>>) attributes {dimension_semantics = [#tpu.dimension_semantics<parallel>], iteration_bounds = array<i64: 1>, scalar_prefetch = 0 : i64, scratch_operands = 0 : i64, tpu.core_type = #tpu.core_type<tc>, window_params = [{transform_indices = @transform_0, window_bounds = array<i64: 8, 128>}, {pipeline_mode = #tpu.pipeline_mode<synchronous>, transform_indices = @transform_1, window_bounds = array<i64: 32, 8>}, {pipeline_mode = #tpu.pipeline_mode<synchronous>, transform_indices = @transform_2, window_bounds = array<i64: 32, 32>}, {pipeline_mode = #tpu.pipeline_mode<synchronous>, transform_indices = @transform_3, window_bounds = array<i64: 32, 32>}, {pipeline_mode = #tpu.pipeline_mode<synchronous>, transform_indices = @transform_4, window_bounds = array<i64: 8, 32>}, {transform_indices = @transform_5, window_bounds = array<i64: 8, 128>}]} {
    %c0 = arith.constant 0 : index
    %c0_0 = arith.constant 0 : index
    %0 = vector.load %arg2[%c0, %c0_0] : memref<32x8xf32, #tpu.memory_space<vmem>>, vector<32x8xf32>
    %c0_1 = arith.constant 0 : index
    %c0_2 = arith.constant 0 : index
    %1 = vector.load %arg1[%c0_1, %c0_2] : memref<8x128xf32, #tpu.memory_space<vmem>>, vector<8x128xf32>
    %cst = arith.constant dense<0.000000e+00> : vector<32x128xf32>
    %2 = tpu.matmul %0, %1, %cst {dimension_numbers = #tpu.dot_dimension_numbers<[1], [0], [0], [1], [0, 0, 1, 1], [], []>} : vector<32x8xf32>, vector<8x128xf32>, vector<32x128xf32> -> vector<32x128xf32>
    %3 = math.tanh %2 : vector<32x128xf32>
    %c0_3 = arith.constant 0 : index
    %c0_4 = arith.constant 0 : index
    %4 = vector.load %arg3[%c0_3, %c0_4] : memref<32x32xf32, #tpu.memory_space<vmem>>, vector<32x32xf32>
    %cst_5 = arith.constant dense<0.000000e+00> : vector<32x128xf32>
    %5 = tpu.matmul %4, %3, %cst_5 {dimension_numbers = #tpu.dot_dimension_numbers<[1], [0], [0], [1], [0, 0, 1, 1], [], []>} : vector<32x32xf32>, vector<32x128xf32>, vector<32x128xf32> -> vector<32x128xf32>
    %6 = math.tanh %5 : vector<32x128xf32>
    %c0_6 = arith.constant 0 : index
    %c0_7 = arith.constant 0 : index
    %7 = vector.load %arg4[%c0_6, %c0_7] : memref<32x32xf32, #tpu.memory_space<vmem>>, vector<32x32xf32>
    %cst_8 = arith.constant dense<0.000000e+00> : vector<32x128xf32>
    %8 = tpu.matmul %7, %6, %cst_8 {dimension_numbers = #tpu.dot_dimension_numbers<[1], [0], [0], [1], [0, 0, 1, 1], [], []>} : vector<32x32xf32>, vector<32x128xf32>, vector<32x128xf32> -> vector<32x128xf32>
    %9 = math.tanh %8 : vector<32x128xf32>
    %c0_9 = arith.constant 0 : index
    %c0_10 = arith.constant 0 : index
    %10 = vector.load %arg5[%c0_9, %c0_10] : memref<8x32xf32, #tpu.memory_space<vmem>>, vector<8x32xf32>
    %cst_11 = arith.constant dense<0.000000e+00> : vector<8x128xf32>
    %11 = tpu.matmul %10, %9, %cst_11 {dimension_numbers = #tpu.dot_dimension_numbers<[1], [0], [0], [1], [0, 0, 1, 1], [], []>} : vector<8x32xf32>, vector<32x128xf32>, vector<8x128xf32> -> vector<8x128xf32>
    %c0_12 = arith.constant 0 : index
    %c0_13 = arith.constant 0 : index
    %12 = vector.load %arg6[%c0_12, %c0_13] : memref<8x128xf32, #tpu.memory_space<vmem>>, vector<8x128xf32>
    tpu.vector_store %arg6[%c0_12, %c0_13], %11 {strides = array<i32>} : memref<8x128xf32, #tpu.memory_space<vmem>>, vector<8x128xf32>,
    return
  }
  func.func @transform_0(%arg0: i32) -> (i32, i32) {
    %c0_i32 = arith.constant 0 : i32
    %c0_i32_0 = arith.constant 0 : i32
    return %c0_i32, %arg0 : i32, i32
  }
  func.func @transform_1(%arg0: i32) -> (i32, i32) {
    %c0_i32 = arith.constant 0 : i32
    %c0_i32_0 = arith.constant 0 : i32
    %c0_i32_1 = arith.constant 0 : i32
    return %c0_i32, %c0_i32_0 : i32, i32
  }
  func.func @transform_2(%arg0: i32) -> (i32, i32) {
    %c0_i32 = arith.constant 0 : i32
    %c0_i32_0 = arith.constant 0 : i32
    %c0_i32_1 = arith.constant 0 : i32
    return %c0_i32, %c0_i32_0 : i32, i32
  }
  func.func @transform_3(%arg0: i32) -> (i32, i32) {
    %c0_i32 = arith.constant 0 : i32
    %c0_i32_0 = arith.constant 0 : i32
    %c0_i32_1 = arith.constant 0 : i32
    return %c0_i32, %c0_i32_0 : i32, i32
  }
  func.func @transform_4(%arg0: i32) -> (i32, i32) {
    %c0_i32 = arith.constant 0 : i32
    %c0_i32_0 = arith.constant 0 : i32
    %c0_i32_1 = arith.constant 0 : i32
    return %c0_i32, %c0_i32_0 : i32, i32
  }
  func.func @transform_5(%arg0: i32) -> (i32, i32) {
    %c0_i32 = arith.constant 0 : i32
    %c0_i32_0 = arith.constant 0 : i32
    return %c0_i32, %arg0 : i32, i32
  }
}

</mosaic_0001>

<llo_original>
// kernel: tpu_custom_call.1
$region0: #{tpu_custom_call.1}
  #allocation0 [shape = 'u32[]', space=smem, size = 0x4, offset = 0x4, fixed_abs, tag = 'smem constant byte address 0x4 - core index']
  #allocation1 [shape = 'u32[144,128]{1,0:T(1,128)}', space=vmem, size = 0x12000, scoped, tag = 'internal scratch']
  %s0 = inlined_call_operand.vmem [shape: f32[8,128], index: 0, kind: input, shape index: {}]
  %s1 = inlined_call_operand.vmem [shape: f32[32,8], index: 1, kind: input, shape index: {}]
  %s2 = inlined_call_operand.vmem [shape: f32[32,32], index: 2, kind: input, shape index: {}]
  %s3 = inlined_call_operand.hbm [shape: f32[32,32], index: 3, kind: input, shape index: {}]
  %s4 = inlined_call_operand.vmem [shape: f32[8,32], index: 4, kind: input, shape index: {}]
  %s5 = inlined_call_operand.hbm [shape: f32[8,128], index: 5, kind: output, shape index: {}]
  %s6 = sld [smem:[#allocation0]]
  $region34: #{tpu_custom_call.1} parent=0
    _
  %s8 = ssub.s32 1, %s6
  %s9 = scalar_select 0, %s8, %s6
  $region1: #{tpu_custom_call.1} parent=0
    #allocation2 [shape = 'u8[16384]{0}', space=vmem, size = 0x4000, scoped, tag = 'input window, operand 3, single buffered']
    #allocation3 [shape = 's32[1]{0}', space=sflag, size = 0x4, scoped, tag = 'scoped memory for tpu_custom_call.1']
    #allocation4 [shape = 's32[1]{0}', space=sflag, size = 0x4, scoped, tag = 'scoped memory for tpu_custom_call.1']
    #allocation5 [shape = 'u8[4096]{0}', space=vmem, size = 0x1000, scoped, tag = 'output window, operand 0, single buffered']
    %10 = vsyncpa [#allocation3], 0
    %11 = vsyncpa [#allocation4], 0
    // Predicated region
    $region2: #{tpu_custom_call.1} parent=1 // pred_check
      _
    $region3: #{tpu_custom_call.1} parent=1 // pred_check_branch
      %13 = sbr.rel (0) target = $region5
    $region4: #{tpu_custom_call.1} parent=1 // pred_region
      _
    $region5: #{tpu_custom_call.1} parent=1 // pred_fallthru
      _
    // Predicated region
    $region6: #{tpu_custom_call.1} parent=1 // pred_check
      _
    $region7: #{tpu_custom_call.1} parent=1 // pred_check_branch
      %15 = sbr.rel (0) target = $region9
    $region8: #{tpu_custom_call.1} parent=1 // pred_region
      _
    $region9: #{tpu_custom_call.1} parent=1 // pred_fallthru
      _
    // Predicated region
    $region10: #{tpu_custom_call.1} parent=1 // pred_check
      _
    $region11: #{tpu_custom_call.1} parent=1 // pred_check_branch
      %17 = sbr.rel (0) target = $region13
    $region12: #{tpu_custom_call.1} parent=1 // pred_region
      _
    $region13: #{tpu_custom_call.1} parent=1 // pred_fallthru
      _
    // Predicated region
    $region14: #{tpu_custom_call.1} parent=1 // pred_check
      _
    $region15: #{tpu_custom_call.1} parent=1 // pred_check_branch
      %19 = sbr.rel (0) target = $region17
    $region16: #{tpu_custom_call.1} parent=1 // pred_region
      %s21 = ssub.s32 512, 512
      %22 = vsyncadd [#allocation3], %s21
      %s23 = sshll.u32 [#allocation2], 4
      %s24 = int_to_ptr.vmem [resolvable:$true] %s23
      %29 = dma.hbm_to_vmem [thread:$0]  %s3, 512, %s24, [#allocation3], 128, 128, 8
    $region17: #{tpu_custom_call.1} parent=1 // pred_fallthru
      _
    // Predicated region
    $region18: #{tpu_custom_call.1} parent=1 // pred_check
      _
    $region19: #{tpu_custom_call.1} parent=1 // pred_check_branch
      %31 = sbr.rel (0) target = $region21
    $region20: #{tpu_custom_call.1} parent=1 // pred_region
      _
    $region21: #{tpu_custom_call.1} parent=1 // pred_fallthru
      _
    // Predicated region
    $region22: #{tpu_custom_call.1} parent=1 // pred_check
      _
    $region23: #{tpu_custom_call.1} parent=1 // pred_check_branch
      %33 = sbr.rel (0) target = $region25
    $region24: #{tpu_custom_call.1} parent=1 // pred_region
      %34 = dma.done [#allocation3], 512
    $region25: #{tpu_custom_call.1} parent=1 // pred_fallthru
      _
    %v35 = vld [vmem:[%s1] sm:$0xff]
    %v36 = vld [vmem:[%s1 + $0x8] sm:$0xff]
    %v37 = vld [vmem:[%s1 + $0x10] sm:$0xff]
    %v38 = vld [vmem:[%s1 + $0x18] sm:$0xff]
    %v39 = vld [vmem:[%s0] sm:$0xff]
    %vm40 = vcmask 64512
    %v42 = vsel %vm40, %v35, 0
    %v45 = vsel %vm40, %v36, 0
    %v48 = vsel %vm40, %v37, 0
    %v51 = vsel %vm40, %v38, 0
    %53 = vmatprep.subr.mxu0 0.0
    %54 = vmatpush1.msra.mxu0 %v39
    %55 = vmatprep.subr.mxu0 0.0
    %56 = vmatpush1.msra.mxu0 0.0
    %57 = vmatprep.subr.mxu0 0.0
    %58 = vmatpush1.msra.mxu0 0.0
    %59 = vmatprep.subr.mxu0 0.0
    %60 = vmatpush1.msra.mxu0 0.0
    %61 = vmatprep.subr.mxu0 0.0
    %62 = vmatpush1.msra.mxu0 0.0
    %63 = vmatprep.subr.mxu0 0.0
    %64 = vmatpush1.msra.mxu0 0.0
    %65 = vmatprep.subr.mxu0 0.0
    %66 = vmatpush1.msra.mxu0 0.0
    %67 = vmatprep.subr.mxu0 0.0
    %68 = vmatpush1.msra.mxu0 0.0
    %69 = vmatprep.subr.mxu0 0.0
    %70 = vmatpush1.msra.mxu0 0.0
    %71 = vmatprep.subr.mxu0 0.0
    %72 = vmatpush1.msra.mxu0 0.0
    %73 = vmatprep.subr.mxu0 0.0
    %74 = vmatpush1.msra.mxu0 0.0
    %75 = vmatprep.subr.mxu0 0.0
    %76 = vmatpush1.msra.mxu0 0.0
    %77 = vmatprep.subr.mxu0 0.0
    %78 = vmatpush1.msra.mxu0 0.0
    %79 = vmatprep.subr.mxu0 0.0
    %80 = vmatpush1.msra.mxu0 0.0
    %81 = vmatprep.subr.mxu0 0.0
    %82 = vmatpush1.msra.mxu0 0.0
    %83 = vmatprep.subr.mxu0 0.0
    %84 = vmatpush1.msra.mxu0 0.0
    %85 = vmatprep.subr.mxu0 0.0
    %86 = vmatpush1.msra.mxu0 0.0
    %87 = vmatprep.subr.mxu0 0.0
    %88 = vmatpush1.msra.mxu0 0.0
    %89 = vmatprep.subr.mxu0 0.0
    %90 = vmatpush1.msra.mxu0 0.0
    %91 = vmatprep.subr.mxu0 0.0
    %92 = vmatpush1.msra.mxu0 0.0
    %93 = vmatprep.subr.mxu0 0.0
    %94 = vmatpush1.msra.mxu0 0.0
    %95 = vmatprep.subr.mxu0 0.0
    %96 = vmatpush1.msra.mxu0 0.0
    %97 = vmatprep.subr.mxu0 0.0
    %98 = vmatpush1.msra.mxu0 0.0
    %99 = vmatprep.subr.mxu0 0.0
    %100 = vmatpush1.msra.mxu0 0.0
    %101 = vmatprep.subr.mxu0 0.0
    %102 = vmatpush1.msra.mxu0 0.0
    %103 = vmatprep.subr.mxu0 0.0
    %104 = vmatpush1.msra.mxu0 0.0
    %105 = vmatprep.subr.mxu0 0.0
    %106 = vmatpush1.msra.mxu0 0.0
    %107 = vmatprep.subr.mxu0 0.0
    %108 = vmatpush1.msra.mxu0 0.0
    %109 = vmatprep.subr.mxu0 0.0
    %110 = vmatpush1.msra.mxu0 0.0
    %111 = vmatprep.subr.mxu0 0.0
    %112 = vmatpush1.msra.mxu0 0.0
    %113 = vmatprep.subr.mxu0 0.0
    %114 = vmatpush1.msra.mxu0 0.0
    %115 = vmatprep.subr.mxu0 0.0
    %116 = vmatpush1.msra.mxu0 0.0
    %117 = vmatprep.mubr.f32.mxu0 0.0
    %118 = vmatmul.mubr.f32.gmra.mrb[0].mxu0 %v42
    %v119 = vpop.f32.mrb[0].mxu0
    %v120 = vadd.f32 0.0, %v119
    %v121 = vpop.f32.mrb[0].mxu0
    %122 = vmatprep.mubr.f32.mxu0 0.0
    %123 = vmatmul.mubr.f32.gmra.mrb[0].mxu0 %v45
    %v124 = vpop.f32.mrb[0].mxu0
    %v125 = vadd.f32 0.0, %v124
    %v126 = vpop.f32.mrb[0].mxu0
    %127 = vmatprep.mubr.f32.mxu0 0.0
    %128 = vmatmul.mubr.f32.gmra.mrb[0].mxu0 %v48
    %v129 = vpop.f32.mrb[0].mxu0
    %v130 = vadd.f32 0.0, %v129
    %v131 = vpop.f32.mrb[0].mxu0
    %132 = vmatprep.mubr.f32.mxu0 0.0
    %133 = vmatmul.mubr.f32.gmra.mrb[0].mxu0 %v51
    %v134 = vpop.f32.mrb[0].mxu0
    %v135 = vadd.f32 0.0, %v134
    %v136 = vpop.f32.mrb[0].mxu0
    %137 = vdwg.mxu0
    %v138 = vtanh.pop %v120
    %v139 = vtanh.pop %v125
    %v140 = vtanh.pop %v130
    %v141 = vtanh.pop %v135
    %v142 = vld [vmem:[%s2] sm:$0xff]
    %v143 = vld [vmem:[%s2 + $0x8] sm:$0xff]
    %v144 = vld [vmem:[%s2 + $0x10] sm:$0xff]
    %v145 = vld [vmem:[%s2 + $0x18] sm:$0xff]
    %vm146 = vcmask 261120
    %v148 = vsel %vm146, %v142, 0
    %v151 = vsel %vm146, %v143, 0
    %v154 = vsel %vm146, %v144, 0
    %v157 = vsel %vm146, %v145, 0
    %159 = vmatprep.subr.mxu0 0.0
    %160 = vmatpush1.msra.mxu0 %v138
    %161 = vmatprep.subr.mxu0 0.0
    %162 = vmatpush1.msra.mxu0 %v139
    %163 = vmatprep.subr.mxu0 0.0
    %164 = vmatpush1.msra.mxu0 %v140
    %165 = vmatprep.subr.mxu0 0.0
    %166 = vmatpush1.msra.mxu0 %v141
    %167 = vmatprep.subr.mxu0 0.0
    %168 = vmatpush1.msra.mxu0 0.0
    %169 = vmatprep.subr.mxu0 0.0
    %170 = vmatpush1.msra.mxu0 0.0
    %171 = vmatprep.subr.mxu0 0.0
    %172 = vmatpush1.msra.mxu0 0.0
    %173 = vmatprep.subr.mxu0 0.0
    %174 = vmatpush1.msra.mxu0 0.0
    %175 = vmatprep.subr.mxu0 0.0
    %176 = vmatpush1.msra.mxu0 0.0
    %177 = vmatprep.subr.mxu0 0.0
    %178 = vmatpush1.msra.mxu0 0.0
    %179 = vmatprep.subr.mxu0 0.0
    %180 = vmatpush1.msra.mxu0 0.0
    %181 = vmatprep.subr.mxu0 0.0
    %182 = vmatpush1.msra.mxu0 0.0
    %183 = vmatprep.subr.mxu0 0.0
    %184 = vmatpush1.msra.mxu0 0.0
    %185 = vmatprep.subr.mxu0 0.0
    %186 = vmatpush1.msra.mxu0 0.0
    %187 = vmatprep.subr.mxu0 0.0
    %188 = vmatpush1.msra.mxu0 0.0
    %189 = vmatprep.subr.mxu0 0.0
    %190 = vmatpush1.msra.mxu0 0.0
    %191 = vmatprep.subr.mxu0 0.0
    %192 = vmatpush1.msra.mxu0 0.0
    %193 = vmatprep.subr.mxu0 0.0
    %194 = vmatpush1.msra.mxu0 0.0
    %195 = vmatprep.subr.mxu0 0.0
    %196 = vmatpush1.msra.mxu0 0.0
    %197 = vmatprep.subr.mxu0 0.0
    %198 = vmatpush1.msra.mxu0 0.0
    %199 = vmatprep.subr.mxu0 0.0
    %200 = vmatpush1.msra.mxu0 0.0
    %201 = vmatprep.subr.mxu0 0.0
    %202 = vmatpush1.msra.mxu0 0.0
    %203 = vmatprep.subr.mxu0 0.0
    %204 = vmatpush1.msra.mxu0 0.0
    %205 = vmatprep.subr.mxu0 0.0
    %206 = vmatpush1.msra.mxu0 0.0
    %207 = vmatprep.subr.mxu0 0.0
    %208 = vmatpush1.msra.mxu0 0.0
    %209 = vmatprep.subr.mxu0 0.0
    %210 = vmatpush1.msra.mxu0 0.0
    %211 = vmatprep.subr.mxu0 0.0
    %212 = vmatpush1.msra.mxu0 0.0
    %213 = vmatprep.subr.mxu0 0.0
    %214 = vmatpush1.msra.mxu0 0.0
    %215 = vmatprep.subr.mxu0 0.0
    %216 = vmatpush1.msra.mxu0 0.0
    %217 = vmatprep.subr.mxu0 0.0
    %218 = vmatpush1.msra.mxu0 0.0
    %219 = vmatprep.subr.mxu0 0.0
    %220 = vmatpush1.msra.mxu0 0.0
    %221 = vmatprep.subr.mxu0 0.0
    %222 = vmatpush1.msra.mxu0 0.0
    %223 = vmatprep.mubr.f32.mxu0 0.0
    %224 = vmatmul.mubr.f32.gmra.mrb[0].mxu0 %v148
    %v225 = vpop.f32.mrb[0].mxu0
    %v226 = vadd.f32 0.0, %v225
    %v227 = vpop.f32.mrb[0].mxu0
    %228 = vmatprep.mubr.f32.mxu0 0.0
    %229 = vmatmul.mubr.f32.gmra.mrb[0].mxu0 %v151
    %v230 = vpop.f32.mrb[0].mxu0
    %v231 = vadd.f32 0.0, %v230
    %v232 = vpop.f32.mrb[0].mxu0
    %233 = vmatprep.mubr.f32.mxu0 0.0
    %234 = vmatmul.mubr.f32.gmra.mrb[0].mxu0 %v154
    %v235 = vpop.f32.mrb[0].mxu0
    %v236 = vadd.f32 0.0, %v235
    %v237 = vpop.f32.mrb[0].mxu0
    %238 = vmatprep.mubr.f32.mxu0 0.0
    %239 = vmatmul.mubr.f32.gmra.mrb[0].mxu0 %v157
    %v240 = vpop.f32.mrb[0].mxu0
    %v241 = vadd.f32 0.0, %v240
    %v242 = vpop.f32.mrb[0].mxu0
    %243 = vdwg.mxu0
    %v244 = vtanh.pop %v226
    %v245 = vtanh.pop %v231
    %v246 = vtanh.pop %v236
    %v247 = vtanh.pop %v241
    %v248 = vld [vmem:[#allocation2] sm:$0xff]
    %v249 = vld [vmem:[#allocation2 + $0x8] sm:$0xff]
    %v250 = vld [vmem:[#allocation2 + $0x10] sm:$0xff]
    %v251 = vld [vmem:[#allocation2 + $0x18] sm:$0xff]
    %v253 = vsel %vm146, %v248, 0
    %v256 = vsel %vm146, %v249, 0
    %v259 = vsel %vm146, %v250, 0
    %v262 = vsel %vm146, %v251, 0
    %264 = vmatprep.subr.mxu0 0.0
    %265 = vmatpush1.msra.mxu0 %v244
    %266 = vmatprep.subr.mxu0 0.0
    %267 = vmatpush1.msra.mxu0 %v245
    %268 = vmatprep.subr.mxu0 0.0
    %269 = vmatpush1.msra.mxu0 %v246
    %270 = vmatprep.subr.mxu0 0.0
    %271 = vmatpush1.msra.mxu0 %v247
    %272 = vmatprep.subr.mxu0 0.0
    %273 = vmatpush1.msra.mxu0 0.0
    %274 = vmatprep.subr.mxu0 0.0
    %275 = vmatpush1.msra.mxu0 0.0
    %276 = vmatprep.subr.mxu0 0.0
    %277 = vmatpush1.msra.mxu0 0.0
    %278 = vmatprep.subr.mxu0 0.0
    %279 = vmatpush1.msra.mxu0 0.0
    %280 = vmatprep.subr.mxu0 0.0
    %281 = vmatpush1.msra.mxu0 0.0
    %282 = vmatprep.subr.mxu0 0.0
    %283 = vmatpush1.msra.mxu0 0.0
    %284 = vmatprep.subr.mxu0 0.0
    %285 = vmatpush1.msra.mxu0 0.0
    %286 = vmatprep.subr.mxu0 0.0
    %287 = vmatpush1.msra.mxu0 0.0
    %288 = vmatprep.subr.mxu0 0.0
    %289 = vmatpush1.msra.mxu0 0.0
    %290 = vmatprep.subr.mxu0 0.0
    %291 = vmatpush1.msra.mxu0 0.0
    %292 = vmatprep.subr.mxu0 0.0
    %293 = vmatpush1.msra.mxu0 0.0
    %294 = vmatprep.subr.mxu0 0.0
    %295 = vmatpush1.msra.mxu0 0.0
    %296 = vmatprep.subr.mxu0 0.0
    %297 = vmatpush1.msra.mxu0 0.0
    %298 = vmatprep.subr.mxu0 0.0
    %299 = vmatpush1.msra.mxu0 0.0
    %300 = vmatprep.subr.mxu0 0.0
    %301 = vmatpush1.msra.mxu0 0.0
    %302 = vmatprep.subr.mxu0 0.0
    %303 = vmatpush1.msra.mxu0 0.0
    %304 = vmatprep.subr.mxu0 0.0
    %305 = vmatpush1.msra.mxu0 0.0
    %306 = vmatprep.subr.mxu0 0.0
    %307 = vmatpush1.msra.mxu0 0.0
    %308 = vmatprep.subr.mxu0 0.0
    %309 = vmatpush1.msra.mxu0 0.0
    %310 = vmatprep.subr.mxu0 0.0
    %311 = vmatpush1.msra.mxu0 0.0
    %312 = vmatprep.subr.mxu0 0.0
    %313 = vmatpush1.msra.mxu0 0.0
    %314 = vmatprep.subr.mxu0 0.0
    %315 = vmatpush1.msra.mxu0 0.0
    %316 = vmatprep.subr.mxu0 0.0
    %317 = vmatpush1.msra.mxu0 0.0
    %318 = vmatprep.subr.mxu0 0.0
    %319 = vmatpush1.msra.mxu0 0.0
    %320 = vmatprep.subr.mxu0 0.0
    %321 = vmatpush1.msra.mxu0 0.0
    %322 = vmatprep.subr.mxu0 0.0
    %323 = vmatpush1.msra.mxu0 0.0
    %324 = vmatprep.subr.mxu0 0.0
    %325 = vmatpush1.msra.mxu0 0.0
    %326 = vmatprep.subr.mxu0 0.0
    %327 = vmatpush1.msra.mxu0 0.0
    %328 = vmatprep.mubr.f32.mxu0 0.0
    %329 = vmatmul.mubr.f32.gmra.mrb[0].mxu0 %v253
    %v330 = vpop.f32.mrb[0].mxu0
    %v331 = vadd.f32 0.0, %v330
    %v332 = vpop.f32.mrb[0].mxu0
    %333 = vmatprep.mubr.f32.mxu0 0.0
    %334 = vmatmul.mubr.f32.gmra.mrb[0].mxu0 %v256
    %v335 = vpop.f32.mrb[0].mxu0
    %v336 = vadd.f32 0.0, %v335
    %v337 = vpop.f32.mrb[0].mxu0
    %338 = vmatprep.mubr.f32.mxu0 0.0
    %339 = vmatmul.mubr.f32.gmra.mrb[0].mxu0 %v259
    %v340 = vpop.f32.mrb[0].mxu0
    %v341 = vadd.f32 0.0, %v340
    %v342 = vpop.f32.mrb[0].mxu0
    %343 = vmatprep.mubr.f32.mxu0 0.0
    %344 = vmatmul.mubr.f32.gmra.mrb[0].mxu0 %v262
    %v345 = vpop.f32.mrb[0].mxu0
    %v346 = vadd.f32 0.0, %v345
    %v347 = vpop.f32.mrb[0].mxu0
    %348 = vdwg.mxu0
    %v349 = vtanh.pop %v331
    %v350 = vtanh.pop %v336
    %v351 = vtanh.pop %v341
    %v352 = vtanh.pop %v346
    %v353 = vld [vmem:[%s4] sm:$0xff]
    %v355 = vsel %vm146, %v353, 0
    %357 = vmatprep.subr.mxu0 0.0
    %358 = vmatpush1.msra.mxu0 %v349
    %359 = vmatprep.subr.mxu0 0.0
    %360 = vmatpush1.msra.mxu0 %v350
    %361 = vmatprep.subr.mxu0 0.0
    %362 = vmatpush1.msra.mxu0 %v351
    %363 = vmatprep.subr.mxu0 0.0
    %364 = vmatpush1.msra.mxu0 %v352
    %365 = vmatprep.subr.mxu0 0.0
    %366 = vmatpush1.msra.mxu0 0.0
    %367 = vmatprep.subr.mxu0 0.0
    %368 = vmatpush1.msra.mxu0 0.0
    %369 = vmatprep.subr.mxu0 0.0
    %370 = vmatpush1.msra.mxu0 0.0
    %371 = vmatprep.subr.mxu0 0.0
    %372 = vmatpush1.msra.mxu0 0.0
    %373 = vmatprep.subr.mxu0 0.0
    %374 = vmatpush1.msra.mxu0 0.0
    %375 = vmatprep.subr.mxu0 0.0
    %376 = vmatpush1.msra.mxu0 0.0
    %377 = vmatprep.subr.mxu0 0.0
    %378 = vmatpush1.msra.mxu0 0.0
    %379 = vmatprep.subr.mxu0 0.0
    %380 = vmatpush1.msra.mxu0 0.0
    %381 = vmatprep.subr.mxu0 0.0
    %382 = vmatpush1.msra.mxu0 0.0
    %383 = vmatprep.subr.mxu0 0.0
    %384 = vmatpush1.msra.mxu0 0.0
    %385 = vmatprep.subr.mxu0 0.0
    %386 = vmatpush1.msra.mxu0 0.0
    %387 = vmatprep.subr.mxu0 0.0
    %388 = vmatpush1.msra.mxu0 0.0
    %389 = vmatprep.subr.mxu0 0.0
    %390 = vmatpush1.msra.mxu0 0.0
    %391 = vmatprep.subr.mxu0 0.0
    %392 = vmatpush1.msra.mxu0 0.0
    %393 = vmatprep.subr.mxu0 0.0
    %394 = vmatpush1.msra.mxu0 0.0
    %395 = vmatprep.subr.mxu0 0.0
    %396 = vmatpush1.msra.mxu0 0.0
    %397 = vmatprep.subr.mxu0 0.0
    %398 = vmatpush1.msra.mxu0 0.0
    %399 = vmatprep.subr.mxu0 0.0
    %400 = vmatpush1.msra.mxu0 0.0
    %401 = vmatprep.subr.mxu0 0.0
    %402 = vmatpush1.msra.mxu0 0.0
    %403 = vmatprep.subr.mxu0 0.0
    %404 = vmatpush1.msra.mxu0 0.0
    %405 = vmatprep.subr.mxu0 0.0
    %406 = vmatpush1.msra.mxu0 0.0
    %407 = vmatprep.subr.mxu0 0.0
    %408 = vmatpush1.msra.mxu0 0.0
    %409 = vmatprep.subr.mxu0 0.0
    %410 = vmatpush1.msra.mxu0 0.0
    %411 = vmatprep.subr.mxu0 0.0
    %412 = vmatpush1.msra.mxu0 0.0
    %413 = vmatprep.subr.mxu0 0.0
    %414 = vmatpush1.msra.mxu0 0.0
    %415 = vmatprep.subr.mxu0 0.0
    %416 = vmatpush1.msra.mxu0 0.0
    %417 = vmatprep.subr.mxu0 0.0
    %418 = vmatpush1.msra.mxu0 0.0
    %419 = vmatprep.subr.mxu0 0.0
    %420 = vmatpush1.msra.mxu0 0.0
    %421 = vmatprep.mubr.f32.mxu0 0.0
    %422 = vmatmul.mubr.f32.gmra.mrb[0].mxu0 %v355
    %v423 = vpop.f32.mrb[0].mxu0
    %v424 = vadd.f32 0.0, %v423
    %v425 = vpop.f32.mrb[0].mxu0
    %426 = vdwg.mxu0
    %427 = vst [vmem:[#allocation5] sm:$0xff] %v424
    // Predicated region
    $region26: #{tpu_custom_call.1} parent=1 // pred_check
      _
    $region27: #{tpu_custom_call.1} parent=1 // pred_check_branch
      %429 = sbr.rel (0) target = $region29
    $region28: #{tpu_custom_call.1} parent=1 // pred_region
      %s431 = ssub.s32 128, 128
      %432 = vsyncadd [#allocation4], %s431
      %s434 = sshll.u32 [#allocation5], 4
      %s435 = int_to_ptr.vmem [resolvable:$true] %s434
      %437 = dma.vmem_to_hbm [thread:$0]  %s435, 128, %s5, [#allocation4]
    $region29: #{tpu_custom_call.1} parent=1 // pred_fallthru
      _
    // Predicated region
    $region30: #{tpu_custom_call.1} parent=1 // pred_check
      _
    $region31: #{tpu_custom_call.1} parent=1 // pred_check_branch
      %439 = sbr.rel (0) target = $region33
    $region32: #{tpu_custom_call.1} parent=1 // pred_region
      %440 = dma.done [#allocation4], 128
    $region33: #{tpu_custom_call.1} parent=1 // pred_fallthru
      _
    %441 = vsyncpa [#allocation3], 1
    %442 = vsyncpa [#allocation4], 1

</llo_original>
